<compile_context>
chip_gen: v7x
topology: tpu7x:2x2x1
jax: 0.10.0
libtpu: 0.0.40
codegen_flags: <defaults>
</compile_context>

<pallas_src>
import jax
import jax.numpy as jnp
from jax import lax
from jax.experimental import pallas as pl
from jax.experimental.pallas import tpu as pltpu

N_FEATURES = 3
N_HIDDEN = 7
N_OUTPUT = 1

_LANE = 128     # vreg lane width
_SUB = 8        # vreg sublane count
_CHUNK_R = 8    # sublane rows processed per inner-loop step (keeps live set in vregs)


def _round_up(a, m):
    return -(-a // m) * m


def _auto_tiling(batch):
    """Pick (tile_r, tile_c, rows): lane/sublane-dense tiles, ~<=1.5 MiB of x per tile."""
    tile_c = 512 if batch >= _SUB * 512 else _LANE
    rows = _round_up(-(-batch // tile_c), _SUB)   # sublane-aligned row count
    tile_r = min(rows, 256)                       # 256x512xf32 = 512 KiB per feature slab
    rows = _round_up(rows, tile_r)                # tile_r divides rows exactly
    return tile_r, tile_c, rows


def _mlp_kernel(w1_ref, b1_ref, w2_ref, b2_ref, x_ref, o_ref):
    # w1_ref: (N_HIDDEN, N_FEATURES) f32 SMEM  (PyTorch (out, in) layout)
    # b1_ref: (N_HIDDEN,)            f32 SMEM
    # w2_ref: (N_HIDDEN,)            f32 SMEM  (flattened (1, N_HIDDEN))
    # b2_ref: (N_OUTPUT,)            f32 SMEM
    # x_ref : (N_FEATURES, tile_r, tile_c) f32 VMEM  -- batch on sublanes x lanes
    # o_ref : (tile_r, tile_c)             f32 VMEM  -- lane-dense output slab
    tile_r, tile_c = o_ref.shape

    # Hoist all weight/bias scalars out of the loops (cheap SMEM scalar reads).
    w1 = [[w1_ref[j, k] for k in range(N_FEATURES)] for j in range(N_HIDDEN)]
    b1 = [b1_ref[j] for j in range(N_HIDDEN)]
    w2 = [w2_ref[j] for j in range(N_HIDDEN)]
    b2 = b2_ref[0]

    def chunk_body(c, carry):
        r0 = pl.multiple_of(c * _CHUNK_R, _CHUNK_R)
        xs = [x_ref[k, pl.ds(r0, _CHUNK_R), :] for k in range(N_FEATURES)]
        acc = jnp.zeros((_CHUNK_R, tile_c), jnp.float32)
        for j in range(N_HIDDEN):
            h = xs[0] * w1[j][0]
            for k in range(1, N_FEATURES):
                h = h + xs[k] * w1[j][k]
            h = jnp.maximum(h + b1[j], 0.0)       # ReLU on the VPU
            acc = acc + h * w2[j]
        o_ref[pl.ds(r0, _CHUNK_R), :] = acc + b2
        return carry

    lax.fori_loop(0, tile_r // _CHUNK_R, chunk_body, 0)


def net_forward(x, w1, b1, w2, b2, *, tile_r=None, tile_c=None):
    """MLP forward. x: (B, n_features); weights in PyTorch nn.Linear layout."""
    assert N_OUTPUT == 1
    batch = x.shape[0]
    if tile_r is None or tile_c is None:
        tile_r, tile_c, rows = _auto_tiling(batch)
    else:
        assert tile_r % _CHUNK_R == 0 and tile_c % _LANE == 0
        rows = _round_up(-(-batch // tile_c), tile_r)
    padded = rows * tile_c
    grid = (rows // tile_r,)

    f32 = jnp.float32
    # Batch onto the lane axis: (B, F) -> (F, B) -> pad -> (F, rows, tile_c).
    xt = jnp.transpose(x.astype(f32))
    if padded != batch:
        xt = jnp.pad(xt, ((0, 0), (0, padded - batch)))
    xt = xt.reshape(N_FEATURES, rows, tile_c)

    # Derive the VMEM budget from actual tile bytes (double-buffered x + out).
    x_bytes = N_FEATURES * tile_r * tile_c * 4
    o_bytes = tile_r * tile_c * 4
    vmem_limit = min(2 * (x_bytes + o_bytes) + (4 << 20), 64 << 20)

    grid_spec = pltpu.PrefetchScalarGridSpec(
        num_scalar_prefetch=4,   # w1, b1, w2, b2 land in SMEM as scalars
        grid=grid,
        in_specs=[
            pl.BlockSpec((N_FEATURES, tile_r, tile_c), lambda i, *_: (0, i, 0)),
        ],
        out_specs=pl.BlockSpec((tile_r, tile_c), lambda i, *_: (i, 0)),
    )

    y2d = pl.pallas_call(
        _mlp_kernel,
        out_shape=jax.ShapeDtypeStruct((rows, tile_c), f32),
        grid_spec=grid_spec,
        compiler_params=pltpu.CompilerParams(
            dimension_semantics=("parallel",),   # batch rows independent (2 TCs on v7x)
            vmem_limit_bytes=vmem_limit,
        ),
    )(
        w1.astype(f32),
        b1.astype(f32),
        w2.reshape(-1).astype(f32),
        b2.reshape(-1).astype(f32),
        xt,
    )

    return y2d.reshape(padded)[:batch].reshape(batch, N_OUTPUT)


def init_params(key):
    """Deterministic init mirroring nn.Linear (uniform(-1/sqrt(fan_in), +))."""
    k1, k2, k3, k4 = jax.random.split(key, 4)
    bound1 = 1.0 / jnp.sqrt(float(N_FEATURES))
    bound2 = 1.0 / jnp.sqrt(float(N_HIDDEN))
    # PyTorch layout: weight is (out_features, in_features).
    w1 = jax.random.uniform(k1, (N_HIDDEN, N_FEATURES), jnp.float32, -bound1, bound1)
    b1 = jax.random.uniform(k2, (N_HIDDEN,), jnp.float32, -bound1, bound1)
    w2 = jax.random.uniform(k3, (N_OUTPUT, N_HIDDEN), jnp.float32, -bound2, bound2)
    b2 = jax.random.uniform(k4, (N_OUTPUT,), jnp.float32, -bound2, bound2)
    return w1, b1, w2, b2


def reference_forward(x, w1, b1, w2, b2):
    h = jnp.maximum(x @ w1.T + b1, 0.0)
    return h @ w2.T + b2


if __name__ == "__main__":
    key = jax.random.PRNGKey(0)
    k_x, k_p, k_x2 = jax.random.split(key, 3)
    w1, b1, w2, b2 = init_params(k_p)

    # Small shape consistent with the module (batch=8, n_features=3).
    x = jax.random.normal(k_x, (8, N_FEATURES), jnp.float32)
    out = jax.block_until_ready(net_forward(x, w1, b1, w2, b2))
    ref = reference_forward(x, w1, b1, w2, b2)
    assert out.shape == (8, N_OUTPUT)
    assert jnp.allclose(out, ref, atol=1e-5, rtol=1e-5)

    # Exercise the multi-step grid + ragged-batch padding path with small tiles.
    x2 = jax.random.normal(k_x2, (3000, N_FEATURES), jnp.float32)
    out2 = jax.block_until_ready(
        net_forward(x2, w1, b1, w2, b2, tile_r=8, tile_c=128))
    ref2 = reference_forward(x2, w1, b1, w2, b2)
    assert out2.shape == (3000, N_OUTPUT)
    assert jnp.allclose(out2, ref2, atol=1e-5, rtol=1e-5)

    print("KERNEL_OK")
</pallas_src>

<mosaic_0001>
module attributes {stable_mosaic.version = 11 : i64} {
  func.func @_mlp_kernel(%arg0: i32, %arg1: memref<7x3xf32, #tpu.memory_space<smem>>, %arg2: memref<7xf32, #tpu.memory_space<smem>>, %arg3: memref<7xf32, #tpu.memory_space<smem>>, %arg4: memref<1xf32, #tpu.memory_space<smem>>, %arg5: memref<3x8x128xf32, #tpu.memory_space<vmem>>, %arg6: memref<8x128xf32, #tpu.memory_space<vmem>>) attributes {dimension_semantics = [#tpu.dimension_semantics<parallel>], iteration_bounds = array<i64: 1>, scalar_prefetch = 4 : i64, scratch_operands = 0 : i64, tpu.core_type = #tpu.core_type<tc>, window_params = [{transform_indices = @transform_0, window_bounds = array<i64: 3, 8, 128>}, {transform_indices = @transform_1, window_bounds = array<i64: 8, 128>}]} {
    %c0 = arith.constant 0 : index
    %c0_0 = arith.constant 0 : index
    %0 = memref.load %arg1[%c0, %c0_0] : memref<7x3xf32, #tpu.memory_space<smem>>
    %c0_1 = arith.constant 0 : index
    %c1 = arith.constant 1 : index
    %1 = memref.load %arg1[%c0_1, %c1] : memref<7x3xf32, #tpu.memory_space<smem>>
    %c0_2 = arith.constant 0 : index
    %c2 = arith.constant 2 : index
    %2 = memref.load %arg1[%c0_2, %c2] : memref<7x3xf32, #tpu.memory_space<smem>>
    %c1_3 = arith.constant 1 : index
    %c0_4 = arith.constant 0 : index
    %3 = memref.load %arg1[%c1_3, %c0_4] : memref<7x3xf32, #tpu.memory_space<smem>>
    %c1_5 = arith.constant 1 : index
    %c1_6 = arith.constant 1 : index
    %4 = memref.load %arg1[%c1_5, %c1_6] : memref<7x3xf32, #tpu.memory_space<smem>>
    %c1_7 = arith.constant 1 : index
    %c2_8 = arith.constant 2 : index
    %5 = memref.load %arg1[%c1_7, %c2_8] : memref<7x3xf32, #tpu.memory_space<smem>>
    %c2_9 = arith.constant 2 : index
    %c0_10 = arith.constant 0 : index
    %6 = memref.load %arg1[%c2_9, %c0_10] : memref<7x3xf32, #tpu.memory_space<smem>>
    %c2_11 = arith.constant 2 : index
    %c1_12 = arith.constant 1 : index
    %7 = memref.load %arg1[%c2_11, %c1_12] : memref<7x3xf32, #tpu.memory_space<smem>>
    %c2_13 = arith.constant 2 : index
    %c2_14 = arith.constant 2 : index
    %8 = memref.load %arg1[%c2_13, %c2_14] : memref<7x3xf32, #tpu.memory_space<smem>>
    %c3 = arith.constant 3 : index
    %c0_15 = arith.constant 0 : index
    %9 = memref.load %arg1[%c3, %c0_15] : memref<7x3xf32, #tpu.memory_space<smem>>
    %c3_16 = arith.constant 3 : index
    %c1_17 = arith.constant 1 : index
    %10 = memref.load %arg1[%c3_16, %c1_17] : memref<7x3xf32, #tpu.memory_space<smem>>
    %c3_18 = arith.constant 3 : index
    %c2_19 = arith.constant 2 : index
    %11 = memref.load %arg1[%c3_18, %c2_19] : memref<7x3xf32, #tpu.memory_space<smem>>
    %c4 = arith.constant 4 : index
    %c0_20 = arith.constant 0 : index
    %12 = memref.load %arg1[%c4, %c0_20] : memref<7x3xf32, #tpu.memory_space<smem>>
    %c4_21 = arith.constant 4 : index
    %c1_22 = arith.constant 1 : index
    %13 = memref.load %arg1[%c4_21, %c1_22] : memref<7x3xf32, #tpu.memory_space<smem>>
    %c4_23 = arith.constant 4 : index
    %c2_24 = arith.constant 2 : index
    %14 = memref.load %arg1[%c4_23, %c2_24] : memref<7x3xf32, #tpu.memory_space<smem>>
    %c5 = arith.constant 5 : index
    %c0_25 = arith.constant 0 : index
    %15 = memref.load %arg1[%c5, %c0_25] : memref<7x3xf32, #tpu.memory_space<smem>>
    %c5_26 = arith.constant 5 : index
    %c1_27 = arith.constant 1 : index
    %16 = memref.load %arg1[%c5_26, %c1_27] : memref<7x3xf32, #tpu.memory_space<smem>>
    %c5_28 = arith.constant 5 : index
    %c2_29 = arith.constant 2 : index
    %17 = memref.load %arg1[%c5_28, %c2_29] : memref<7x3xf32, #tpu.memory_space<smem>>
    %c6 = arith.constant 6 : index
    %c0_30 = arith.constant 0 : index
    %18 = memref.load %arg1[%c6, %c0_30] : memref<7x3xf32, #tpu.memory_space<smem>>
    %c6_31 = arith.constant 6 : index
    %c1_32 = arith.constant 1 : index
    %19 = memref.load %arg1[%c6_31, %c1_32] : memref<7x3xf32, #tpu.memory_space<smem>>
    %c6_33 = arith.constant 6 : index
    %c2_34 = arith.constant 2 : index
    %20 = memref.load %arg1[%c6_33, %c2_34] : memref<7x3xf32, #tpu.memory_space<smem>>
    %c0_35 = arith.constant 0 : index
    %21 = memref.load %arg2[%c0_35] : memref<7xf32, #tpu.memory_space<smem>>
    %c1_36 = arith.constant 1 : index
    %22 = memref.load %arg2[%c1_36] : memref<7xf32, #tpu.memory_space<smem>>
    %c2_37 = arith.constant 2 : index
    %23 = memref.load %arg2[%c2_37] : memref<7xf32, #tpu.memory_space<smem>>
    %c3_38 = arith.constant 3 : index
    %24 = memref.load %arg2[%c3_38] : memref<7xf32, #tpu.memory_space<smem>>
    %c4_39 = arith.constant 4 : index
    %25 = memref.load %arg2[%c4_39] : memref<7xf32, #tpu.memory_space<smem>>
    %c5_40 = arith.constant 5 : index
    %26 = memref.load %arg2[%c5_40] : memref<7xf32, #tpu.memory_space<smem>>
    %c6_41 = arith.constant 6 : index
    %27 = memref.load %arg2[%c6_41] : memref<7xf32, #tpu.memory_space<smem>>
    %c0_42 = arith.constant 0 : index
    %28 = memref.load %arg3[%c0_42] : memref<7xf32, #tpu.memory_space<smem>>
    %c1_43 = arith.constant 1 : index
    %29 = memref.load %arg3[%c1_43] : memref<7xf32, #tpu.memory_space<smem>>
    %c2_44 = arith.constant 2 : index
    %30 = memref.load %arg3[%c2_44] : memref<7xf32, #tpu.memory_space<smem>>
    %c3_45 = arith.constant 3 : index
    %31 = memref.load %arg3[%c3_45] : memref<7xf32, #tpu.memory_space<smem>>
    %c4_46 = arith.constant 4 : index
    %32 = memref.load %arg3[%c4_46] : memref<7xf32, #tpu.memory_space<smem>>
    %c5_47 = arith.constant 5 : index
    %33 = memref.load %arg3[%c5_47] : memref<7xf32, #tpu.memory_space<smem>>
    %c6_48 = arith.constant 6 : index
    %34 = memref.load %arg3[%c6_48] : memref<7xf32, #tpu.memory_space<smem>>
    %c0_49 = arith.constant 0 : index
    %35 = memref.load %arg4[%c0_49] : memref<1xf32, #tpu.memory_space<smem>>
    %c0_i32 = arith.constant 0 : i32
    %c8_i32 = arith.constant 8 : i32
    %36 = arith.muli %c0_i32, %c8_i32 : i32
    %37 = tpu.assume_multiple %36, 8 : i32
    %c0_50 = arith.constant 0 : index
    %38 = arith.index_cast %37 : i32 to index
    %c0_51 = arith.constant 0 : index
    %39 = vector.load %arg5[%c0_50, %38, %c0_51] : memref<3x8x128xf32, #tpu.memory_space<vmem>>, vector<1x8x128xf32>
    %40 = vector.shape_cast %39 : vector<1x8x128xf32> to vector<8x128xf32>
    %c1_52 = arith.constant 1 : index
    %41 = arith.index_cast %37 : i32 to index
    %c0_53 = arith.constant 0 : index
    %42 = vector.load %arg5[%c1_52, %41, %c0_53] : memref<3x8x128xf32, #tpu.memory_space<vmem>>, vector<1x8x128xf32>
    %43 = vector.shape_cast %42 : vector<1x8x128xf32> to vector<8x128xf32>
    %c2_54 = arith.constant 2 : index
    %44 = arith.index_cast %37 : i32 to index
    %c0_55 = arith.constant 0 : index
    %45 = vector.load %arg5[%c2_54, %44, %c0_55] : memref<3x8x128xf32, #tpu.memory_space<vmem>>, vector<1x8x128xf32>
    %46 = vector.shape_cast %45 : vector<1x8x128xf32> to vector<8x128xf32>
    %cst = arith.constant 0.000000e+00 : f32
    %47 = vector.broadcast %cst : f32 to vector<8x128xf32>
    %48 = vector.broadcast %0 : f32 to vector<8x128xf32>
    %49 = arith.mulf %40, %48 : vector<8x128xf32>
    %50 = vector.broadcast %1 : f32 to vector<8x128xf32>
    %51 = arith.mulf %43, %50 : vector<8x128xf32>
    %52 = arith.addf %49, %51 : vector<8x128xf32>
    %53 = vector.broadcast %2 : f32 to vector<8x128xf32>
    %54 = arith.mulf %46, %53 : vector<8x128xf32>
    %55 = arith.addf %52, %54 : vector<8x128xf32>
    %56 = vector.broadcast %21 : f32 to vector<8x128xf32>
    %57 = arith.addf %55, %56 : vector<8x128xf32>
    %cst_56 = arith.constant 0.000000e+00 : f32
    %58 = vector.broadcast %cst_56 : f32 to vector<8x128xf32>
    %59 = arith.maximumf %57, %58 : vector<8x128xf32>
    %60 = vector.broadcast %28 : f32 to vector<8x128xf32>
    %61 = arith.mulf %59, %60 : vector<8x128xf32>
    %62 = arith.addf %47, %61 : vector<8x128xf32>
    %63 = vector.broadcast %3 : f32 to vector<8x128xf32>
    %64 = arith.mulf %40, %63 : vector<8x128xf32>
    %65 = vector.broadcast %4 : f32 to vector<8x128xf32>
    %66 = arith.mulf %43, %65 : vector<8x128xf32>
    %67 = arith.addf %64, %66 : vector<8x128xf32>
    %68 = vector.broadcast %5 : f32 to vector<8x128xf32>
    %69 = arith.mulf %46, %68 : vector<8x128xf32>
    %70 = arith.addf %67, %69 : vector<8x128xf32>
    %71 = vector.broadcast %22 : f32 to vector<8x128xf32>
    %72 = arith.addf %70, %71 : vector<8x128xf32>
    %cst_57 = arith.constant 0.000000e+00 : f32
    %73 = vector.broadcast %cst_57 : f32 to vector<8x128xf32>
    %74 = arith.maximumf %72, %73 : vector<8x128xf32>
    %75 = vector.broadcast %29 : f32 to vector<8x128xf32>
    %76 = arith.mulf %74, %75 : vector<8x128xf32>
    %77 = arith.addf %62, %76 : vector<8x128xf32>
    %78 = vector.broadcast %6 : f32 to vector<8x128xf32>
    %79 = arith.mulf %40, %78 : vector<8x128xf32>
    %80 = vector.broadcast %7 : f32 to vector<8x128xf32>
    %81 = arith.mulf %43, %80 : vector<8x128xf32>
    %82 = arith.addf %79, %81 : vector<8x128xf32>
    %83 = vector.broadcast %8 : f32 to vector<8x128xf32>
    %84 = arith.mulf %46, %83 : vector<8x128xf32>
    %85 = arith.addf %82, %84 : vector<8x128xf32>
    %86 = vector.broadcast %23 : f32 to vector<8x128xf32>
    %87 = arith.addf %85, %86 : vector<8x128xf32>
    %cst_58 = arith.constant 0.000000e+00 : f32
    %88 = vector.broadcast %cst_58 : f32 to vector<8x128xf32>
    %89 = arith.maximumf %87, %88 : vector<8x128xf32>
    %90 = vector.broadcast %30 : f32 to vector<8x128xf32>
    %91 = arith.mulf %89, %90 : vector<8x128xf32>
    %92 = arith.addf %77, %91 : vector<8x128xf32>
    %93 = vector.broadcast %9 : f32 to vector<8x128xf32>
    %94 = arith.mulf %40, %93 : vector<8x128xf32>
    %95 = vector.broadcast %10 : f32 to vector<8x128xf32>
    %96 = arith.mulf %43, %95 : vector<8x128xf32>
    %97 = arith.addf %94, %96 : vector<8x128xf32>
    %98 = vector.broadcast %11 : f32 to vector<8x128xf32>
    %99 = arith.mulf %46, %98 : vector<8x128xf32>
    %100 = arith.addf %97, %99 : vector<8x128xf32>
    %101 = vector.broadcast %24 : f32 to vector<8x128xf32>
    %102 = arith.addf %100, %101 : vector<8x128xf32>
    %cst_59 = arith.constant 0.000000e+00 : f32
    %103 = vector.broadcast %cst_59 : f32 to vector<8x128xf32>
    %104 = arith.maximumf %102, %103 : vector<8x128xf32>
    %105 = vector.broadcast %31 : f32 to vector<8x128xf32>
    %106 = arith.mulf %104, %105 : vector<8x128xf32>
    %107 = arith.addf %92, %106 : vector<8x128xf32>
    %108 = vector.broadcast %12 : f32 to vector<8x128xf32>
    %109 = arith.mulf %40, %108 : vector<8x128xf32>
    %110 = vector.broadcast %13 : f32 to vector<8x128xf32>
    %111 = arith.mulf %43, %110 : vector<8x128xf32>
    %112 = arith.addf %109, %111 : vector<8x128xf32>
    %113 = vector.broadcast %14 : f32 to vector<8x128xf32>
    %114 = arith.mulf %46, %113 : vector<8x128xf32>
    %115 = arith.addf %112, %114 : vector<8x128xf32>
    %116 = vector.broadcast %25 : f32 to vector<8x128xf32>
    %117 = arith.addf %115, %116 : vector<8x128xf32>
    %cst_60 = arith.constant 0.000000e+00 : f32
    %118 = vector.broadcast %cst_60 : f32 to vector<8x128xf32>
    %119 = arith.maximumf %117, %118 : vector<8x128xf32>
    %120 = vector.broadcast %32 : f32 to vector<8x128xf32>
    %121 = arith.mulf %119, %120 : vector<8x128xf32>
    %122 = arith.addf %107, %121 : vector<8x128xf32>
    %123 = vector.broadcast %15 : f32 to vector<8x128xf32>
    %124 = arith.mulf %40, %123 : vector<8x128xf32>
    %125 = vector.broadcast %16 : f32 to vector<8x128xf32>
    %126 = arith.mulf %43, %125 : vector<8x128xf32>
    %127 = arith.addf %124, %126 : vector<8x128xf32>
    %128 = vector.broadcast %17 : f32 to vector<8x128xf32>
    %129 = arith.mulf %46, %128 : vector<8x128xf32>
    %130 = arith.addf %127, %129 : vector<8x128xf32>
    %131 = vector.broadcast %26 : f32 to vector<8x128xf32>
    %132 = arith.addf %130, %131 : vector<8x128xf32>
    %cst_61 = arith.constant 0.000000e+00 : f32
    %133 = vector.broadcast %cst_61 : f32 to vector<8x128xf32>
    %134 = arith.maximumf %132, %133 : vector<8x128xf32>
    %135 = vector.broadcast %33 : f32 to vector<8x128xf32>
    %136 = arith.mulf %134, %135 : vector<8x128xf32>
    %137 = arith.addf %122, %136 : vector<8x128xf32>
    %138 = vector.broadcast %18 : f32 to vector<8x128xf32>
    %139 = arith.mulf %40, %138 : vector<8x128xf32>
    %140 = vector.broadcast %19 : f32 to vector<8x128xf32>
    %141 = arith.mulf %43, %140 : vector<8x128xf32>
    %142 = arith.addf %139, %141 : vector<8x128xf32>
    %143 = vector.broadcast %20 : f32 to vector<8x128xf32>
    %144 = arith.mulf %46, %143 : vector<8x128xf32>
    %145 = arith.addf %142, %144 : vector<8x128xf32>
    %146 = vector.broadcast %27 : f32 to vector<8x128xf32>
    %147 = arith.addf %145, %146 : vector<8x128xf32>
    %cst_62 = arith.constant 0.000000e+00 : f32
    %148 = vector.broadcast %cst_62 : f32 to vector<8x128xf32>
    %149 = arith.maximumf %147, %148 : vector<8x128xf32>
    %150 = vector.broadcast %34 : f32 to vector<8x128xf32>
    %151 = arith.mulf %149, %150 : vector<8x128xf32>
    %152 = arith.addf %137, %151 : vector<8x128xf32>
    %153 = vector.broadcast %35 : f32 to vector<8x128xf32>
    %154 = arith.addf %152, %153 : vector<8x128xf32>
    %155 = arith.index_cast %37 : i32 to index
    %c0_63 = arith.constant 0 : index
    %156 = vector.load %arg6[%155, %c0_63] : memref<8x128xf32, #tpu.memory_space<vmem>>, vector<8x128xf32>
    tpu.vector_store %arg6[%155, %c0_63], %154 {strides = array<i32>} : memref<8x128xf32, #tpu.memory_space<vmem>>, vector<8x128xf32>,
    %c1_i32 = arith.constant 1 : i32
    return
  }
  func.func @transform_0(%arg0: i32, %arg1: memref<7x3xf32, #tpu.memory_space<smem>>, %arg2: memref<7xf32, #tpu.memory_space<smem>>, %arg3: memref<7xf32, #tpu.memory_space<smem>>, %arg4: memref<1xf32, #tpu.memory_space<smem>>) -> (i32, i32, i32) {
    %c0_i32 = arith.constant 0 : i32
    %c0_i32_0 = arith.constant 0 : i32
    %c0_i32_1 = arith.constant 0 : i32
    return %c0_i32, %arg0, %c0_i32_0 : i32, i32, i32
  }
  func.func @transform_1(%arg0: i32, %arg1: memref<7x3xf32, #tpu.memory_space<smem>>, %arg2: memref<7xf32, #tpu.memory_space<smem>>, %arg3: memref<7xf32, #tpu.memory_space<smem>>, %arg4: memref<1xf32, #tpu.memory_space<smem>>) -> (i32, i32) {
    %c0_i32 = arith.constant 0 : i32
    %c0_i32_0 = arith.constant 0 : i32
    return %arg0, %c0_i32 : i32, i32
  }
}

</mosaic_0001>

<llo_original>
// kernel: tpu_custom_call.1
$region0: #{tpu_custom_call.1}
  #allocation0 [shape = 'u32[]', space=smem, size = 0x4, offset = 0x4, fixed_abs, tag = 'smem constant byte address 0x4 - core index']
  #allocation1 [shape = 'u32[144,128]{1,0:T(1,128)}', space=vmem, size = 0x12000, scoped, tag = 'internal scratch']
  #allocation2 [shape = 's32[1]{0}', space=sflag, size = 0x4, scoped, tag = 'scoped memory for tpu_custom_call.1']
  #allocation3 [shape = 'u8[4096]{0}', space=smem, size = 0x1000, scoped, tag = 'prefetched SMEM operand 0']
  #allocation4 [shape = 'u8[512]{0}', space=smem, size = 0x200, scoped, tag = 'prefetched SMEM operand 1']
  #allocation5 [shape = 'u8[512]{0}', space=smem, size = 0x200, scoped, tag = 'prefetched SMEM operand 2']
  #allocation6 [shape = 'f32[1]{0:T(128)S(6)}', space=smem, size = 0x200, scoped, tag = 'prefetched SMEM operand 3']
  %s0 = inlined_call_operand.vmem [shape: f32[7,3], index: 0, kind: input, shape index: {}]
  %s1 = inlined_call_operand.vmem [shape: f32[7], index: 1, kind: input, shape index: {}]
  %s2 = inlined_call_operand.vmem [shape: f32[7], index: 2, kind: input, shape index: {}]
  %s3 = inlined_call_operand.<no memory space> [shape: f32[1], index: 3, kind: input, shape index: {}]
  %s4 = inlined_call_operand.vmem [shape: f32[3,8,128], index: 4, kind: input, shape index: {}]
  %s5 = inlined_call_operand.hbm [shape: f32[8,128], index: 5, kind: output, shape index: {}]
  %s6 = sld [smem:[#allocation0]]
  $region14: #{tpu_custom_call.1} parent=0
    _
  %s8 = ssub.s32 1, %s6
  %s9 = scalar_select 0, %s8, %s6
  %s10 = sshll.u32 %s0, 4
  %s11 = int_to_ptr.vmem [resolvable:$true] %s10
  %13 = dma.vmem_to_smem %s11, 128, [#allocation3], [#allocation2]
  %s14 = sshll.u32 %s1, 4
  %s15 = int_to_ptr.vmem [resolvable:$true] %s14
  %17 = dma.vmem_to_smem %s15, 16, [#allocation4], [#allocation2]
  %s18 = sshll.u32 %s2, 4
  %s19 = int_to_ptr.vmem [resolvable:$true] %s18
  %21 = dma.vmem_to_smem %s19, 16, [#allocation5], [#allocation2]
  %22 = sst [smem:[#allocation6]] %s3
  %23 = dma.done [#allocation2], 160
  %24 = sfence
  $region1: #{tpu_custom_call.1} parent=0
    #allocation7 [shape = 'u8[4096]{0}', space=vmem, size = 0x1000, scoped, tag = 'output window, operand 0, single buffered']
    #allocation8 [shape = 's32[1]{0}', space=sflag, size = 0x4, scoped, tag = 'scoped memory for tpu_custom_call.1']
    %25 = vsyncpa [#allocation8], 0
    // Predicated region
    $region2: #{tpu_custom_call.1} parent=1 // pred_check
      _
    $region3: #{tpu_custom_call.1} parent=1 // pred_check_branch
      %27 = sbr.rel (0) target = $region5
    $region4: #{tpu_custom_call.1} parent=1 // pred_region
      _
    $region5: #{tpu_custom_call.1} parent=1 // pred_fallthru
      _
    %s28 = sld [smem:[#allocation3]]
    %s29 = sld [smem:[#allocation3 + $0x1]]
    %s30 = sld [smem:[#allocation3 + $0x2]]
    %s31 = sld [smem:[#allocation3 + $0x80]]
    %s32 = sld [smem:[#allocation3 + $0x81]]
    %s33 = sld [smem:[#allocation3 + $0x82]]
    %s34 = sld [smem:[#allocation3 + $0x100]]
    %s35 = sld [smem:[#allocation3 + $0x101]]
    %s36 = sld [smem:[#allocation3 + $0x102]]
    %s37 = sld [smem:[#allocation3 + $0x180]]
    %s38 = sld [smem:[#allocation3 + $0x181]]
    %s39 = sld [smem:[#allocation3 + $0x182]]
    %s40 = sld [smem:[#allocation3 + $0x200]]
    %s41 = sld [smem:[#allocation3 + $0x201]]
    %s42 = sld [smem:[#allocation3 + $0x202]]
    %s43 = sld [smem:[#allocation3 + $0x280]]
    %s44 = sld [smem:[#allocation3 + $0x281]]
    %s45 = sld [smem:[#allocation3 + $0x282]]
    %s46 = sld [smem:[#allocation3 + $0x300]]
    %s47 = sld [smem:[#allocation3 + $0x301]]
    %s48 = sld [smem:[#allocation3 + $0x302]]
    %s49 = sld [smem:[#allocation4]]
    %s50 = sld [smem:[#allocation4 + $0x1]]
    %s51 = sld [smem:[#allocation4 + $0x2]]
    %s52 = sld [smem:[#allocation4 + $0x3]]
    %s53 = sld [smem:[#allocation4 + $0x4]]
    %s54 = sld [smem:[#allocation4 + $0x5]]
    %s55 = sld [smem:[#allocation4 + $0x6]]
    %s56 = sld [smem:[#allocation5]]
    %s57 = sld [smem:[#allocation5 + $0x1]]
    %s58 = sld [smem:[#allocation5 + $0x2]]
    %s59 = sld [smem:[#allocation5 + $0x3]]
    %s60 = sld [smem:[#allocation5 + $0x4]]
    %s61 = sld [smem:[#allocation5 + $0x5]]
    %s62 = sld [smem:[#allocation5 + $0x6]]
    %s63 = sld [smem:[#allocation6]]
    %v64 = vld [vmem:[%s4] sm:$0xff]
    %s65 = sadd.s32 0, 8
    %s66 = scalar_lea.vmem %s4, %s65
    %v67 = vld [vmem:[%s66] sm:$0xff]
    %s68 = sadd.s32 0, 16
    %s69 = scalar_lea.vmem %s4, %s68
    %v70 = vld [vmem:[%s69] sm:$0xff]
    %v71 = vstv %s28
    %v72 = vmul.f32 %v64, %v71
    %v73 = vstv %s29
    %v74 = vmul.f32 %v67, %v73
    %v75 = vadd.f32 %v72, %v74
    %v76 = vstv %s30
    %v77 = vmul.f32 %v70, %v76
    %v78 = vadd.f32 %v75, %v77
    %v79 = vstv %s49
    %v80 = vadd.f32 %v78, %v79
    %v81 = vmax.f32 %v80, 0.0
    %v82 = vstv %s56
    %v83 = vmul.f32 %v81, %v82
    %v84 = vadd.f32 %v83, 0.0
    %v85 = vstv %s31
    %v86 = vmul.f32 %v64, %v85
    %v87 = vstv %s32
    %v88 = vmul.f32 %v67, %v87
    %v89 = vadd.f32 %v86, %v88
    %v90 = vstv %s33
    %v91 = vmul.f32 %v70, %v90
    %v92 = vadd.f32 %v89, %v91
    %v93 = vstv %s50
    %v94 = vadd.f32 %v92, %v93
    %v95 = vmax.f32 %v94, 0.0
    %v96 = vstv %s57
    %v97 = vmul.f32 %v95, %v96
    %v98 = vadd.f32 %v84, %v97
    %v99 = vstv %s34
    %v100 = vmul.f32 %v64, %v99
    %v101 = vstv %s35
    %v102 = vmul.f32 %v67, %v101
    %v103 = vadd.f32 %v100, %v102
    %v104 = vstv %s36
    %v105 = vmul.f32 %v70, %v104
    %v106 = vadd.f32 %v103, %v105
    %v107 = vstv %s51
    %v108 = vadd.f32 %v106, %v107
    %v109 = vmax.f32 %v108, 0.0
    %v110 = vstv %s58
    %v111 = vmul.f32 %v109, %v110
    %v112 = vadd.f32 %v98, %v111
    %v113 = vstv %s37
    %v114 = vmul.f32 %v64, %v113
    %v115 = vstv %s38
    %v116 = vmul.f32 %v67, %v115
    %v117 = vadd.f32 %v114, %v116
    %v118 = vstv %s39
    %v119 = vmul.f32 %v70, %v118
    %v120 = vadd.f32 %v117, %v119
    %v121 = vstv %s52
    %v122 = vadd.f32 %v120, %v121
    %v123 = vmax.f32 %v122, 0.0
    %v124 = vstv %s59
    %v125 = vmul.f32 %v123, %v124
    %v126 = vadd.f32 %v112, %v125
    %v127 = vstv %s40
    %v128 = vmul.f32 %v64, %v127
    %v129 = vstv %s41
    %v130 = vmul.f32 %v67, %v129
    %v131 = vadd.f32 %v128, %v130
    %v132 = vstv %s42
    %v133 = vmul.f32 %v70, %v132
    %v134 = vadd.f32 %v131, %v133
    %v135 = vstv %s53
    %v136 = vadd.f32 %v134, %v135
    %v137 = vmax.f32 %v136, 0.0
    %v138 = vstv %s60
    %v139 = vmul.f32 %v137, %v138
    %v140 = vadd.f32 %v126, %v139
    %v141 = vstv %s43
    %v142 = vmul.f32 %v64, %v141
    %v143 = vstv %s44
    %v144 = vmul.f32 %v67, %v143
    %v145 = vadd.f32 %v142, %v144
    %v146 = vstv %s45
    %v147 = vmul.f32 %v70, %v146
    %v148 = vadd.f32 %v145, %v147
    %v149 = vstv %s54
    %v150 = vadd.f32 %v148, %v149
    %v151 = vmax.f32 %v150, 0.0
    %v152 = vstv %s61
    %v153 = vmul.f32 %v151, %v152
    %v154 = vadd.f32 %v140, %v153
    %v155 = vstv %s46
    %v156 = vmul.f32 %v64, %v155
    %v157 = vstv %s47
    %v158 = vmul.f32 %v67, %v157
    %v159 = vadd.f32 %v156, %v158
    %v160 = vstv %s48
    %v161 = vmul.f32 %v70, %v160
    %v162 = vadd.f32 %v159, %v161
    %v163 = vstv %s55
    %v164 = vadd.f32 %v162, %v163
    %v165 = vmax.f32 %v164, 0.0
    %v166 = vstv %s62
    %v167 = vmul.f32 %v165, %v166
    %v168 = vadd.f32 %v154, %v167
    %v169 = vstv %s63
    %v170 = vadd.f32 %v168, %v169
    %171 = vst [vmem:[#allocation7] sm:$0xff] %v170
    // Predicated region
    $region6: #{tpu_custom_call.1} parent=1 // pred_check
      _
    $region7: #{tpu_custom_call.1} parent=1 // pred_check_branch
      %173 = sbr.rel (0) target = $region9
    $region8: #{tpu_custom_call.1} parent=1 // pred_region
      %s175 = ssub.s32 128, 128
      %176 = vsyncadd [#allocation8], %s175
      %s178 = sshll.u32 [#allocation7], 4
      %s179 = int_to_ptr.vmem [resolvable:$true] %s178
      %181 = dma.vmem_to_hbm [thread:$0]  %s179, 128, %s5, [#allocation8]
    $region9: #{tpu_custom_call.1} parent=1 // pred_fallthru
      _
    // Predicated region
    $region10: #{tpu_custom_call.1} parent=1 // pred_check
      _
    $region11: #{tpu_custom_call.1} parent=1 // pred_check_branch
      %183 = sbr.rel (0) target = $region13
    $region12: #{tpu_custom_call.1} parent=1 // pred_region
      %184 = dma.done [#allocation8], 128
    $region13: #{tpu_custom_call.1} parent=1 // pred_fallthru
      _
    %185 = vsyncpa [#allocation8], 1

</llo_original>
